<compile_context>
chip_gen: v6e
topology: v6e:2x2x1
jax: 0.10.0
libtpu: 0.0.40
codegen_flags: <defaults>
</compile_context>

<pallas_src>
import functools

import jax
import jax.numpy as jnp
from jax import lax
from jax.experimental import pallas as pl
from jax.experimental.pallas import tpu as pltpu


# ----------------------------------------------------------------------------
# Pallas kernel: fused BN1+ReLU -> conv1(1x3) -> BN2+ReLU -> conv2(1x3[,s=2])
#                + residual (identity / 1x1 conv / maxpool(1,2))
# ----------------------------------------------------------------------------
def _resblock_kernel(*refs, ch_up, time_down, fuse_taps, TR, W, C, Ca):
    f32 = jnp.float32
    bf16 = jnp.bfloat16

    if ch_up:
        (x_ref, s1_ref, t1_ref, w1_ref, s2_ref, t2_ref, w2_ref, b2_ref,
         wr_ref, br_ref, o_ref, pad_ref) = refs
    else:
        (x_ref, s1_ref, t1_ref, w1_ref, s2_ref, t2_ref, w2_ref, b2_ref,
         o_ref, pad_ref) = refs
        wr_ref = br_ref = None

    stride = 2 if time_down else 1
    Wo = W // stride
    sdt = pad_ref.dtype

    # Zero only the two padding edge columns (interior stores never touch them).
    # Done every step so it is also correct under "parallel" megacore sharding.
    zedge = jnp.zeros((TR, 1, C), sdt)
    pad_ref[:, 0:1, :] = zedge
    pad_ref[:, W + 1:W + 2, :] = zedge

    def conv3(w_ref, Wout, st, Cout, bias):
        """(1,3) conv over the padded stage. K-fused matmul only when the lane-axis
        concat is alignment-free (C % 128 == 0); otherwise 3 per-tap matmuls
        accumulated in f32 (no (TR,Wout,3C) temporary, no lane relayout)."""
        def tap(k):
            if st == 1:
                return pad_ref[:, k:k + Wout, :]
            return pad_ref[:, pl.ds(k, Wout, stride=2), :]

        if fuse_taps:
            slab = jnp.concatenate([tap(0), tap(1), tap(2)], axis=-1)
            acc = jnp.dot(slab.reshape(TR * Wout, 3 * C).astype(bf16), w_ref[...],
                          preferred_element_type=f32)
        else:
            acc = None
            for k in range(3):
                d = jnp.dot(tap(k).reshape(TR * Wout, C).astype(bf16),
                            w_ref[k * C:(k + 1) * C, :],
                            preferred_element_type=f32)
                acc = d if acc is None else acc + d
        if bias is not None:
            acc = acc + bias
        return acc.reshape(TR, Wout, Cout)

    # --- BatchNorm1 (folded affine) + ReLU; Dropout2d == identity in eval ------
    h = jnp.maximum(x_ref[...].astype(f32) * s1_ref[0] + t1_ref[0], 0.0)
    pad_ref[:, 1:W + 1, :] = h.astype(sdt)
    del h

    # --- conv1: (1,3), stride 1.  Its bias is folded into t2 (BN2 shift). ------
    y1 = conv3(w1_ref, W, 1, C, None)

    # --- BatchNorm2 (folded, incl. conv1 bias) + ReLU ---------------------------
    h2 = jnp.maximum(y1 * s2_ref[0] + t2_ref[0], 0.0)
    pad_ref[:, 1:W + 1, :] = h2.astype(sdt)                 # edges still zero
    del y1, h2

    # --- last_conv: (1,3), stride (1,2) if time_down else (1,1) ----------------
    y2 = conv3(w2_ref, Wo, stride, Ca, b2_ref[...])

    # --- residual path: re-read x_ref (no long-lived f32 copy of x) -------------
    if time_down:
        xe = x_ref[:, pl.ds(0, Wo, stride=2), :]
        xo = x_ref[:, pl.ds(1, Wo, stride=2), :]
        if ch_up:
            # MaxPool(Conv1x1(x)) == max of the 1x1 conv on even / odd columns
            # (valid because the bias is a per-channel constant).
            r_ev = jnp.dot(xe.reshape(TR * Wo, C).astype(bf16), wr_ref[...],
                           preferred_element_type=f32)
            r_od = jnp.dot(xo.reshape(TR * Wo, C).astype(bf16), wr_ref[...],
                           preferred_element_type=f32)
            r = (jnp.maximum(r_ev, r_od) + br_ref[...]).reshape(TR, Wo, Ca)
        else:
            r = jnp.maximum(xe, xo).astype(f32)              # MaxPool(1,2)
    else:
        if ch_up:
            r = (jnp.dot(x_ref[...].reshape(TR * W, C).astype(bf16), wr_ref[...],
                         preferred_element_type=f32)
                 + br_ref[...]).reshape(TR, W, Ca)
        else:
            r = x_ref[...].astype(f32)                       # identity (Ca == C)

    o_ref[...] = (y2 + r).astype(o_ref.dtype)


# ----------------------------------------------------------------------------
# Tile-size selection
# ----------------------------------------------------------------------------
def _padded_2d_bytes(a):
    r, c = a.shape
    rup8 = ((r + 7) // 8) * 8
    rup128 = ((c + 127) // 128) * 128
    return rup8 * rup128 * a.dtype.itemsize


def _pick_block_rows(R, W, Wo, C, Ca, x_bytes, out_bytes, stage_bytes,
                     vmem_limit, const_bytes, cap=None):
    rup8 = lambda n: ((n + 7) // 8) * 8
    rup128 = lambda n: ((n + 127) // 128) * 128
    per_row = (2 * rup8(W) * rup128(C) * x_bytes            # double-buffered x block
               + rup8(W + 2) * rup128(C) * stage_bytes      # padded stage scratch
               + 2 * rup8(Wo) * rup128(Ca) * out_bytes      # double-buffered out block
               + 4 * rup8(W) * rup128(C) * 4                # f32 temporaries (h, conv acc)
               + 2 * rup8(Wo) * rup128(Ca) * 4)             # f32 output-side temporaries
    budget = max(vmem_limit - const_bytes - (4 << 20), per_row)   # headroom for Mosaic
    tr = max(1, budget // per_row)
    # Keep >= ~4 grid steps when R allows: both v7x TensorCores get work and the
    # prefetch/writeback pipeline actually overlaps.
    tr = min(tr, max(1, -(-R // 4)))
    if cap is not None:
        tr = min(tr, int(cap))
    return int(max(1, min(tr, R)))


# ----------------------------------------------------------------------------
# (R, W, C)-native entry point (use this to chain blocks without NCHW transposes)
# ----------------------------------------------------------------------------
def res_block_meg2_pallas_rwc(xr, p, *, ch_up=False, time_down=False,
                              eps=1e-5, block_rows=None):
    R, W, C = xr.shape
    Ca = p["conv2_w"].shape[0]
    stride = 2 if time_down else 1
    if time_down:
        assert W % 2 == 0, "even width required for stride-2 / maxpool path"
    Wo = W // stride

    # Per-generation VMEM budget (v7x has 64 MiB physical; v5e/v6e have 128 MiB).
    try:
        vmem_phys = int(pltpu.get_tpu_info().vmem_capacity_bytes)
    except Exception:
        vmem_phys = 64 * 1024 * 1024                 # conservative fallback
    vmem_limit = min((vmem_phys * 3) // 4, 96 * 1024 * 1024)

    f32 = jnp.float32
    bf16 = jnp.bfloat16

    # Fold BatchNorm into affine scale/shift (inference semantics).
    s1 = (p["bn1_gamma"] / jnp.sqrt(p["bn1_var"] + eps)).astype(f32).reshape(1, C)
    t1 = (p["bn1_beta"] - p["bn1_mean"] * s1[0]).astype(f32).reshape(1, C)
    s2 = (p["bn2_gamma"] / jnp.sqrt(p["bn2_var"] + eps)).astype(f32).reshape(1, C)
    # conv1 bias folded into BN2 shift: BN2(conv + b1) = conv*s2 + (t2 + s2*b1).
    t2 = (p["bn2_beta"] - p["bn2_mean"] * s2[0]
          + s2[0] * p["conv1_b"]).astype(f32).reshape(1, C)

    # Conv weights for the per-tap / fused matmuls:
    #   (Cout, Cin, 1, 3) -> (3*Cin, Cout), row index = k*Cin + cin.  bf16 for MXU.
    w1 = jnp.transpose(p["conv1_w"][:, :, 0, :], (2, 1, 0)).reshape(3 * C, C).astype(bf16)
    w2 = jnp.transpose(p["conv2_w"][:, :, 0, :], (2, 1, 0)).reshape(3 * C, Ca).astype(bf16)
    b2 = p["conv2_b"].astype(f32).reshape(1, Ca)

    inputs = [xr, s1, t1, w1, s2, t2, w2, b2]
    if ch_up:
        wr = p["convr_w"][:, :, 0, 0].T.astype(bf16)          # (C, Ca)
        br = p["convr_b"].astype(f32).reshape(1, Ca)
        inputs += [wr, br]

    # bf16 padded stage for stride-1 configs; time_down keeps an f32 stage so the
    # stride-2 sublane reads stay on the plain (32-bit) strided-load path.
    stage_dtype = jnp.float32 if time_down else jnp.bfloat16

    # Constants are double-buffered by the pipeline -> subtract from the budget.
    const_bytes = 2 * sum(_padded_2d_bytes(a) for a in inputs[1:])

    TR = _pick_block_rows(R, W, Wo, C, Ca,
                          x_bytes=xr.dtype.itemsize,
                          out_bytes=xr.dtype.itemsize,
                          stage_bytes=jnp.dtype(stage_dtype).itemsize,
                          vmem_limit=vmem_limit, const_bytes=const_bytes,
                          cap=block_rows)

    def full_spec(a):
        nd = a.ndim
        return pl.BlockSpec(a.shape, lambda r, _nd=nd: (0,) * _nd)

    in_specs = [pl.BlockSpec((TR, W, C), lambda r: (r, 0, 0))]
    in_specs += [full_spec(a) for a in inputs[1:]]

    fuse_taps = (C % 128 == 0)   # lane-aligned concat only; otherwise per-tap dots
    kernel = functools.partial(_resblock_kernel, ch_up=ch_up, time_down=time_down,
                               fuse_taps=fuse_taps, TR=TR, W=W, C=C, Ca=Ca)

    return pl.pallas_call(
        kernel,
        out_shape=jax.ShapeDtypeStruct((R, Wo, Ca), xr.dtype),
        grid_spec=pltpu.PrefetchScalarGridSpec(
            num_scalar_prefetch=0,
            grid=(pl.cdiv(R, TR),),
            in_specs=in_specs,
            out_specs=pl.BlockSpec((TR, Wo, Ca), lambda r: (r, 0, 0)),
            scratch_shapes=[pltpu.VMEM((TR, W + 2, C), stage_dtype)],
        ),
        compiler_params=pltpu.CompilerParams(
            dimension_semantics=("parallel",),       # independent row tiles
            vmem_limit_bytes=vmem_limit,
        ),
    )(*inputs)


# ----------------------------------------------------------------------------
# NCHW wrapper (API parity with the PyTorch module)
# ----------------------------------------------------------------------------
def res_block_meg2_pallas(x, p, *, ch_up=False, time_down=False, eps=1e-5,
                          block_rows=None):
    N, C, H, W = x.shape
    Ca = p["conv2_w"].shape[0]
    Wo = W // (2 if time_down else 1)
    xr = jnp.transpose(x, (0, 2, 3, 1)).reshape(N * H, W, C)
    out_r = res_block_meg2_pallas_rwc(xr, p, ch_up=ch_up, time_down=time_down,
                                      eps=eps, block_rows=block_rows)
    return out_r.reshape(N, H, Wo, Ca).transpose(0, 3, 1, 2)


# ----------------------------------------------------------------------------
# Deterministic parameter init (same shapes as the PyTorch module's __init__)
# ----------------------------------------------------------------------------
def init_params(key, nb_ch, *, ch_up=False, c=64):
    Ca = nb_ch + c if ch_up else nb_ch
    ks = jax.random.split(key, 14)
    n = lambda k, s, sc=1.0: sc * jax.random.normal(k, s, jnp.float32)
    p = dict(
        bn1_gamma=1.0 + 0.1 * n(ks[0], (nb_ch,)),
        bn1_beta=0.1 * n(ks[1], (nb_ch,)),
        bn1_mean=0.1 * n(ks[2], (nb_ch,)),
        bn1_var=1.0 + 0.1 * jax.random.uniform(ks[3], (nb_ch,), jnp.float32),
        conv1_w=n(ks[4], (nb_ch, nb_ch, 1, 3), (3.0 * nb_ch) ** -0.5),
        conv1_b=0.1 * n(ks[5], (nb_ch,)),
        bn2_gamma=1.0 + 0.1 * n(ks[6], (nb_ch,)),
        bn2_beta=0.1 * n(ks[7], (nb_ch,)),
        bn2_mean=0.1 * n(ks[8], (nb_ch,)),
        bn2_var=1.0 + 0.1 * jax.random.uniform(ks[9], (nb_ch,), jnp.float32),
        conv2_w=n(ks[10], (Ca, nb_ch, 1, 3), (3.0 * nb_ch) ** -0.5),
        conv2_b=0.1 * n(ks[11], (Ca,)),
    )
    if ch_up:
        p["convr_w"] = n(ks[12], (Ca, nb_ch, 1, 1), nb_ch ** -0.5)
        p["convr_b"] = 0.1 * n(ks[13], (Ca,))
    return p


# ----------------------------------------------------------------------------
# Pure-JAX reference of the PyTorch forward (eval mode) for verification
# ----------------------------------------------------------------------------
def ref_forward(x, p, *, ch_up=False, time_down=False, eps=1e-5):
    hp = jax.lax.Precision.HIGHEST

    def bn(v, g, b, m, var):
        sc = g / jnp.sqrt(var + eps)
        return v * sc[None, :, None, None] + (b - m * sc)[None, :, None, None]

    def conv(v, w, b, sw, pad):
        y = lax.conv_general_dilated(v, w, window_strides=(1, sw),
                                     padding=((0, 0), (pad, pad)),
                                     dimension_numbers=("NCHW", "OIHW", "NCHW"),
                                     precision=hp)
        return y + b[None, :, None, None]

    h = jax.nn.relu(bn(x, p["bn1_gamma"], p["bn1_beta"], p["bn1_mean"], p["bn1_var"]))
    h = conv(h, p["conv1_w"], p["conv1_b"], 1, 1)
    h = jax.nn.relu(bn(h, p["bn2_gamma"], p["bn2_beta"], p["bn2_mean"], p["bn2_var"]))
    h = conv(h, p["conv2_w"], p["conv2_b"], 2 if time_down else 1, 1)

    r = x
    if ch_up:
        r = conv(r, p["convr_w"], p["convr_b"], 1, 0)
    if time_down:
        N_, C_, H_, W_ = r.shape
        r = r.reshape(N_, C_, H_, W_ // 2, 2).max(axis=-1)
    return h + r


def _check(out, ref, name):
    err = float(jnp.max(jnp.abs(out - ref)))
    # bf16 MXU operands (f32 accumulation) vs f32-HIGHEST reference.
    tol = 6e-2 + 1e-2 * float(jnp.max(jnp.abs(ref)))
    assert err < tol, f"{name}: max abs err {err} > tol {tol}"


if __name__ == "__main__":
    key = jax.random.PRNGKey(0)
    kx, kp1, kp2, kp3, kp4 = jax.random.split(key, 5)

    N, C, H, W = 2, 8, 4, 16
    x = jax.random.normal(kx, (N, C, H, W), jnp.float32)

    # Config 1: default ResBlock_Meg2(nb_ch=8)  (identity residual)
    p0 = init_params(kp1, C, ch_up=False)
    out0 = res_block_meg2_pallas(x, p0, ch_up=False, time_down=False)
    jax.block_until_ready(out0)
    assert out0.shape == (N, C, H, W)
    _check(out0, ref_forward(x, p0, ch_up=False, time_down=False), "default")

    # Config 2: ch_up=True (1x1-conv residual), small c for the test
    p1 = init_params(kp2, C, ch_up=True, c=8)
    out1 = res_block_meg2_pallas(x, p1, ch_up=True, time_down=False)
    jax.block_until_ready(out1)
    assert out1.shape == (N, C + 8, H, W)
    _check(out1, ref_forward(x, p1, ch_up=True, time_down=False), "ch_up")

    # Config 3: time_down=True (stride-2 last conv + MaxPool(1,2) residual)
    p2 = init_params(kp3, C, ch_up=False)
    out2 = res_block_meg2_pallas(x, p2, ch_up=False, time_down=True)
    jax.block_until_ready(out2)
    assert out2.shape == (N, C, H, W // 2)
    _check(out2, ref_forward(x, p2, ch_up=False, time_down=True), "time_down")

    # Config 4: ch_up=True and time_down=True (Conv1x1 + MaxPool residual)
    p3 = init_params(kp4, C, ch_up=True, c=8)
    out3 = res_block_meg2_pallas(x, p3, ch_up=True, time_down=True)
    jax.block_until_ready(out3)
    assert out3.shape == (N, C + 8, H, W // 2)
    _check(out3, ref_forward(x, p3, ch_up=True, time_down=True), "ch_up+time_down")

    print("KERNEL_OK")
</pallas_src>

<mosaic_0001>
module attributes {stable_mosaic.version = 11 : i64} {
  func.func @_resblock_kernel(%arg0: i32, %arg1: memref<2x16x8xf32, #tpu.memory_space<vmem>>, %arg2: memref<1x8xf32, #tpu.memory_space<vmem>>, %arg3: memref<1x8xf32, #tpu.memory_space<vmem>>, %arg4: memref<24x8xbf16, #tpu.memory_space<vmem>>, %arg5: memref<1x8xf32, #tpu.memory_space<vmem>>, %arg6: memref<1x8xf32, #tpu.memory_space<vmem>>, %arg7: memref<24x8xbf16, #tpu.memory_space<vmem>>, %arg8: memref<1x8xf32, #tpu.memory_space<vmem>>, %arg9: memref<2x16x8xf32, #tpu.memory_space<vmem>>, %arg10: memref<2x18x8xbf16, #tpu.memory_space<vmem>>) attributes {dimension_semantics = [#tpu.dimension_semantics<parallel>], iteration_bounds = array<i64: 4>, scalar_prefetch = 0 : i64, scratch_operands = 1 : i64, tpu.core_type = #tpu.core_type<tc>, window_params = [{transform_indices = @transform_0, window_bounds = array<i64: 2, 16, 8>}, {pipeline_mode = #tpu.pipeline_mode<synchronous>, transform_indices = @transform_1, window_bounds = array<i64: 1, 8>}, {pipeline_mode = #tpu.pipeline_mode<synchronous>, transform_indices = @transform_2, window_bounds = array<i64: 1, 8>}, {pipeline_mode = #tpu.pipeline_mode<synchronous>, transform_indices = @transform_3, window_bounds = array<i64: 24, 8>}, {pipeline_mode = #tpu.pipeline_mode<synchronous>, transform_indices = @transform_4, window_bounds = array<i64: 1, 8>}, {pipeline_mode = #tpu.pipeline_mode<synchronous>, transform_indices = @transform_5, window_bounds = array<i64: 1, 8>}, {pipeline_mode = #tpu.pipeline_mode<synchronous>, transform_indices = @transform_6, window_bounds = array<i64: 24, 8>}, {pipeline_mode = #tpu.pipeline_mode<synchronous>, transform_indices = @transform_7, window_bounds = array<i64: 1, 8>}, {transform_indices = @transform_8, window_bounds = array<i64: 2, 16, 8>}]} {
    %cst = arith.constant 0.000000e+00 : bf16
    %0 = vector.broadcast %cst : bf16 to vector<2x1x8xbf16>
    %c0 = arith.constant 0 : index
    %c0_0 = arith.constant 0 : index
    %c0_1 = arith.constant 0 : index
    %1 = vector.load %arg10[%c0, %c0_0, %c0_1] : memref<2x18x8xbf16, #tpu.memory_space<vmem>>, vector<2x1x8xbf16>
    tpu.vector_store %arg10[%c0, %c0_0, %c0_1], %0 {strides = array<i32>} : memref<2x18x8xbf16, #tpu.memory_space<vmem>>, vector<2x1x8xbf16>,
    %c0_2 = arith.constant 0 : index
    %c17 = arith.constant 17 : index
    %c0_3 = arith.constant 0 : index
    %2 = vector.load %arg10[%c0_2, %c17, %c0_3] : memref<2x18x8xbf16, #tpu.memory_space<vmem>>, vector<2x1x8xbf16>
    tpu.vector_store %arg10[%c0_2, %c17, %c0_3], %0 {strides = array<i32>} : memref<2x18x8xbf16, #tpu.memory_space<vmem>>, vector<2x1x8xbf16>,
    %c0_4 = arith.constant 0 : index
    %c0_5 = arith.constant 0 : index
    %c0_6 = arith.constant 0 : index
    %3 = vector.load %arg1[%c0_4, %c0_5, %c0_6] : memref<2x16x8xf32, #tpu.memory_space<vmem>>, vector<2x16x8xf32>
    %c0_7 = arith.constant 0 : index
    %c0_8 = arith.constant 0 : index
    %4 = vector.load %arg2[%c0_7, %c0_8] : memref<1x8xf32, #tpu.memory_space<vmem>>, vector<1x8xf32>
    %5 = vector.shape_cast %4 : vector<1x8xf32> to vector<8xf32>
    %6 = vector.shape_cast %5 : vector<8xf32> to vector<1x1x8xf32>
    %7 = vector.broadcast %6 : vector<1x1x8xf32> to vector<2x16x8xf32>
    %8 = arith.mulf %3, %7 : vector<2x16x8xf32>
    %c0_9 = arith.constant 0 : index
    %c0_10 = arith.constant 0 : index
    %9 = vector.load %arg3[%c0_9, %c0_10] : memref<1x8xf32, #tpu.memory_space<vmem>>, vector<1x8xf32>
    %10 = vector.shape_cast %9 : vector<1x8xf32> to vector<8xf32>
    %11 = vector.shape_cast %10 : vector<8xf32> to vector<1x1x8xf32>
    %12 = vector.broadcast %11 : vector<1x1x8xf32> to vector<2x16x8xf32>
    %13 = arith.addf %8, %12 : vector<2x16x8xf32>
    %cst_11 = arith.constant 0.000000e+00 : f32
    %14 = vector.broadcast %cst_11 : f32 to vector<2x16x8xf32>
    %15 = arith.maximumf %13, %14 : vector<2x16x8xf32>
    %16 = arith.truncf %15 : vector<2x16x8xf32> to vector<2x16x8xbf16>
    %c0_12 = arith.constant 0 : index
    %c1 = arith.constant 1 : index
    %c0_13 = arith.constant 0 : index
    %17 = vector.load %arg10[%c0_12, %c1, %c0_13] : memref<2x18x8xbf16, #tpu.memory_space<vmem>>, vector<2x16x8xbf16>
    tpu.vector_store %arg10[%c0_12, %c1, %c0_13], %16 {strides = array<i32>} : memref<2x18x8xbf16, #tpu.memory_space<vmem>>, vector<2x16x8xbf16>,
    %c0_14 = arith.constant 0 : index
    %c0_15 = arith.constant 0 : index
    %c0_16 = arith.constant 0 : index
    %18 = vector.load %arg10[%c0_14, %c0_15, %c0_16] : memref<2x18x8xbf16, #tpu.memory_space<vmem>>, vector<2x16x8xbf16>
    %19 = vector.shape_cast %18 : vector<2x16x8xbf16> to vector<32x8xbf16>
    %c0_17 = arith.constant 0 : index
    %c0_18 = arith.constant 0 : index
    %20 = vector.load %arg4[%c0_17, %c0_18] : memref<24x8xbf16, #tpu.memory_space<vmem>>, vector<8x8xbf16>
    %cst_19 = arith.constant dense<0.000000e+00> : vector<32x8xf32>
    %21 = tpu.matmul %19, %20, %cst_19 {dimension_numbers = #tpu.dot_dimension_numbers<[1], [0], [0], [1], [0, 0, 1, 1], [], []>} : vector<32x8xbf16>, vector<8x8xbf16>, vector<32x8xf32> -> vector<32x8xf32>
    %c0_20 = arith.constant 0 : index
    %c1_21 = arith.constant 1 : index
    %c0_22 = arith.constant 0 : index
    %22 = vector.load %arg10[%c0_20, %c1_21, %c0_22] : memref<2x18x8xbf16, #tpu.memory_space<vmem>>, vector<2x16x8xbf16>
    %23 = vector.shape_cast %22 : vector<2x16x8xbf16> to vector<32x8xbf16>
    %c8 = arith.constant 8 : index
    %c0_23 = arith.constant 0 : index
    %24 = vector.load %arg4[%c8, %c0_23] : memref<24x8xbf16, #tpu.memory_space<vmem>>, vector<8x8xbf16>
    %cst_24 = arith.constant dense<0.000000e+00> : vector<32x8xf32>
    %25 = tpu.matmul %23, %24, %cst_24 {dimension_numbers = #tpu.dot_dimension_numbers<[1], [0], [0], [1], [0, 0, 1, 1], [], []>} : vector<32x8xbf16>, vector<8x8xbf16>, vector<32x8xf32> -> vector<32x8xf32>
    %26 = arith.addf %21, %25 : vector<32x8xf32>
    %c0_25 = arith.constant 0 : index
    %c2 = arith.constant 2 : index
    %c0_26 = arith.constant 0 : index
    %27 = vector.load %arg10[%c0_25, %c2, %c0_26] : memref<2x18x8xbf16, #tpu.memory_space<vmem>>, vector<2x16x8xbf16>
    %28 = vector.shape_cast %27 : vector<2x16x8xbf16> to vector<32x8xbf16>
    %c16 = arith.constant 16 : index
    %c0_27 = arith.constant 0 : index
    %29 = vector.load %arg4[%c16, %c0_27] : memref<24x8xbf16, #tpu.memory_space<vmem>>, vector<8x8xbf16>
    %cst_28 = arith.constant dense<0.000000e+00> : vector<32x8xf32>
    %30 = tpu.matmul %28, %29, %cst_28 {dimension_numbers = #tpu.dot_dimension_numbers<[1], [0], [0], [1], [0, 0, 1, 1], [], []>} : vector<32x8xbf16>, vector<8x8xbf16>, vector<32x8xf32> -> vector<32x8xf32>
    %31 = arith.addf %26, %30 : vector<32x8xf32>
    %32 = vector.shape_cast %31 : vector<32x8xf32> to vector<2x16x8xf32>
    %c0_29 = arith.constant 0 : index
    %c0_30 = arith.constant 0 : index
    %33 = vector.load %arg5[%c0_29, %c0_30] : memref<1x8xf32, #tpu.memory_space<vmem>>, vector<1x8xf32>
    %34 = vector.shape_cast %33 : vector<1x8xf32> to vector<8xf32>
    %35 = vector.shape_cast %34 : vector<8xf32> to vector<1x1x8xf32>
    %36 = vector.broadcast %35 : vector<1x1x8xf32> to vector<2x16x8xf32>
    %37 = arith.mulf %32, %36 : vector<2x16x8xf32>
    %c0_31 = arith.constant 0 : index
    %c0_32 = arith.constant 0 : index
    %38 = vector.load %arg6[%c0_31, %c0_32] : memref<1x8xf32, #tpu.memory_space<vmem>>, vector<1x8xf32>
    %39 = vector.shape_cast %38 : vector<1x8xf32> to vector<8xf32>
    %40 = vector.shape_cast %39 : vector<8xf32> to vector<1x1x8xf32>
    %41 = vector.broadcast %40 : vector<1x1x8xf32> to vector<2x16x8xf32>
    %42 = arith.addf %37, %41 : vector<2x16x8xf32>
    %cst_33 = arith.constant 0.000000e+00 : f32
    %43 = vector.broadcast %cst_33 : f32 to vector<2x16x8xf32>
    %44 = arith.maximumf %42, %43 : vector<2x16x8xf32>
    %45 = arith.truncf %44 : vector<2x16x8xf32> to vector<2x16x8xbf16>
    %c0_34 = arith.constant 0 : index
    %c1_35 = arith.constant 1 : index
    %c0_36 = arith.constant 0 : index
    %46 = vector.load %arg10[%c0_34, %c1_35, %c0_36] : memref<2x18x8xbf16, #tpu.memory_space<vmem>>, vector<2x16x8xbf16>
    tpu.vector_store %arg10[%c0_34, %c1_35, %c0_36], %45 {strides = array<i32>} : memref<2x18x8xbf16, #tpu.memory_space<vmem>>, vector<2x16x8xbf16>,
    %c0_37 = arith.constant 0 : index
    %c0_38 = arith.constant 0 : index
    %47 = vector.load %arg8[%c0_37, %c0_38] : memref<1x8xf32, #tpu.memory_space<vmem>>, vector<1x8xf32>
    %c0_39 = arith.constant 0 : index
    %c0_40 = arith.constant 0 : index
    %c0_41 = arith.constant 0 : index
    %48 = vector.load %arg10[%c0_39, %c0_40, %c0_41] : memref<2x18x8xbf16, #tpu.memory_space<vmem>>, vector<2x16x8xbf16>
    %49 = vector.shape_cast %48 : vector<2x16x8xbf16> to vector<32x8xbf16>
    %c0_42 = arith.constant 0 : index
    %c0_43 = arith.constant 0 : index
    %50 = vector.load %arg7[%c0_42, %c0_43] : memref<24x8xbf16, #tpu.memory_space<vmem>>, vector<8x8xbf16>
    %cst_44 = arith.constant dense<0.000000e+00> : vector<32x8xf32>
    %51 = tpu.matmul %49, %50, %cst_44 {dimension_numbers = #tpu.dot_dimension_numbers<[1], [0], [0], [1], [0, 0, 1, 1], [], []>} : vector<32x8xbf16>, vector<8x8xbf16>, vector<32x8xf32> -> vector<32x8xf32>
    %c0_45 = arith.constant 0 : index
    %c1_46 = arith.constant 1 : index
    %c0_47 = arith.constant 0 : index
    %52 = vector.load %arg10[%c0_45, %c1_46, %c0_47] : memref<2x18x8xbf16, #tpu.memory_space<vmem>>, vector<2x16x8xbf16>
    %53 = vector.shape_cast %52 : vector<2x16x8xbf16> to vector<32x8xbf16>
    %c8_48 = arith.constant 8 : index
    %c0_49 = arith.constant 0 : index
    %54 = vector.load %arg7[%c8_48, %c0_49] : memref<24x8xbf16, #tpu.memory_space<vmem>>, vector<8x8xbf16>
    %cst_50 = arith.constant dense<0.000000e+00> : vector<32x8xf32>
    %55 = tpu.matmul %53, %54, %cst_50 {dimension_numbers = #tpu.dot_dimension_numbers<[1], [0], [0], [1], [0, 0, 1, 1], [], []>} : vector<32x8xbf16>, vector<8x8xbf16>, vector<32x8xf32> -> vector<32x8xf32>
    %56 = arith.addf %51, %55 : vector<32x8xf32>
    %c0_51 = arith.constant 0 : index
    %c2_52 = arith.constant 2 : index
    %c0_53 = arith.constant 0 : index
    %57 = vector.load %arg10[%c0_51, %c2_52, %c0_53] : memref<2x18x8xbf16, #tpu.memory_space<vmem>>, vector<2x16x8xbf16>
    %58 = vector.shape_cast %57 : vector<2x16x8xbf16> to vector<32x8xbf16>
    %c16_54 = arith.constant 16 : index
    %c0_55 = arith.constant 0 : index
    %59 = vector.load %arg7[%c16_54, %c0_55] : memref<24x8xbf16, #tpu.memory_space<vmem>>, vector<8x8xbf16>
    %cst_56 = arith.constant dense<0.000000e+00> : vector<32x8xf32>
    %60 = tpu.matmul %58, %59, %cst_56 {dimension_numbers = #tpu.dot_dimension_numbers<[1], [0], [0], [1], [0, 0, 1, 1], [], []>} : vector<32x8xbf16>, vector<8x8xbf16>, vector<32x8xf32> -> vector<32x8xf32>
    %61 = arith.addf %56, %60 : vector<32x8xf32>
    %62 = vector.broadcast %47 : vector<1x8xf32> to vector<32x8xf32>
    %63 = arith.addf %61, %62 : vector<32x8xf32>
    %64 = vector.shape_cast %63 : vector<32x8xf32> to vector<2x16x8xf32>
    %c0_57 = arith.constant 0 : index
    %c0_58 = arith.constant 0 : index
    %c0_59 = arith.constant 0 : index
    %65 = vector.load %arg1[%c0_57, %c0_58, %c0_59] : memref<2x16x8xf32, #tpu.memory_space<vmem>>, vector<2x16x8xf32>
    %66 = arith.addf %64, %65 : vector<2x16x8xf32>
    %c0_60 = arith.constant 0 : index
    %c0_61 = arith.constant 0 : index
    %c0_62 = arith.constant 0 : index
    %67 = vector.load %arg9[%c0_60, %c0_61, %c0_62] : memref<2x16x8xf32, #tpu.memory_space<vmem>>, vector<2x16x8xf32>
    tpu.vector_store %arg9[%c0_60, %c0_61, %c0_62], %66 {strides = array<i32>} : memref<2x16x8xf32, #tpu.memory_space<vmem>>, vector<2x16x8xf32>,
    return
  }
  func.func @transform_0(%arg0: i32) -> (i32, i32, i32) {
    %c0_i32 = arith.constant 0 : i32
    %c0_i32_0 = arith.constant 0 : i32
    %c0_i32_1 = arith.constant 0 : i32
    return %arg0, %c0_i32, %c0_i32_0 : i32, i32, i32
  }
  func.func @transform_1(%arg0: i32) -> (i32, i32) {
    %c0_i32 = arith.constant 0 : i32
    %c0_i32_0 = arith.constant 0 : i32
    %c0_i32_1 = arith.constant 0 : i32
    return %c0_i32, %c0_i32_0 : i32, i32
  }
  func.func @transform_2(%arg0: i32) -> (i32, i32) {
    %c0_i32 = arith.constant 0 : i32
    %c0_i32_0 = arith.constant 0 : i32
    %c0_i32_1 = arith.constant 0 : i32
    return %c0_i32, %c0_i32_0 : i32, i32
  }
  func.func @transform_3(%arg0: i32) -> (i32, i32) {
    %c0_i32 = arith.constant 0 : i32
    %c0_i32_0 = arith.constant 0 : i32
    %c0_i32_1 = arith.constant 0 : i32
    return %c0_i32, %c0_i32_0 : i32, i32
  }
  func.func @transform_4(%arg0: i32) -> (i32, i32) {
    %c0_i32 = arith.constant 0 : i32
    %c0_i32_0 = arith.constant 0 : i32
    %c0_i32_1 = arith.constant 0 : i32
    return %c0_i32, %c0_i32_0 : i32, i32
  }
  func.func @transform_5(%arg0: i32) -> (i32, i32) {
    %c0_i32 = arith.constant 0 : i32
    %c0_i32_0 = arith.constant 0 : i32
    %c0_i32_1 = arith.constant 0 : i32
    return %c0_i32, %c0_i32_0 : i32, i32
  }
  func.func @transform_6(%arg0: i32) -> (i32, i32) {
    %c0_i32 = arith.constant 0 : i32
    %c0_i32_0 = arith.constant 0 : i32
    %c0_i32_1 = arith.constant 0 : i32
    return %c0_i32, %c0_i32_0 : i32, i32
  }
  func.func @transform_7(%arg0: i32) -> (i32, i32) {
    %c0_i32 = arith.constant 0 : i32
    %c0_i32_0 = arith.constant 0 : i32
    %c0_i32_1 = arith.constant 0 : i32
    return %c0_i32, %c0_i32_0 : i32, i32
  }
  func.func @transform_8(%arg0: i32) -> (i32, i32, i32) {
    %c0_i32 = arith.constant 0 : i32
    %c0_i32_0 = arith.constant 0 : i32
    %c0_i32_1 = arith.constant 0 : i32
    return %arg0, %c0_i32, %c0_i32_0 : i32, i32, i32
  }
}

</mosaic_0001>

<llo_original>
// kernel: tpu_custom_call.1
$region0: #{tpu_custom_call.1}
  #allocation0 [shape = 'u32[]', space=smem, size = 0x4, offset = 0x4, fixed_abs, tag = 'smem constant byte address 0x4 - core index']
  #allocation1 [shape = 'u32[144,128]{1,0:T(1,128)}', space=vmem, size = 0x12000, scoped, tag = 'internal scratch']
  #allocation2 [shape = 'bf16[2,18,8]{2,1,0:T(8,128)(2,1)}', space=vmem, size = 0x3000, scoped, tag = 'scratch operand']
  %s0 = inlined_call_operand.vmem [shape: f32[8,16,8], index: 0, kind: input, shape index: {}]
  %s1 = inlined_call_operand.vmem [shape: f32[1,8], index: 1, kind: input, shape index: {}]
  %s2 = inlined_call_operand.vmem [shape: f32[1,8], index: 2, kind: input, shape index: {}]
  %s3 = inlined_call_operand.vmem [shape: bf16[24,8], index: 3, kind: input, shape index: {}]
  %s4 = inlined_call_operand.vmem [shape: f32[1,8], index: 4, kind: input, shape index: {}]
  %s5 = inlined_call_operand.vmem [shape: f32[1,8], index: 5, kind: input, shape index: {}]
  %s6 = inlined_call_operand.vmem [shape: bf16[24,8], index: 6, kind: input, shape index: {}]
  %s7 = inlined_call_operand.vmem [shape: f32[1,8], index: 7, kind: input, shape index: {}]
  %s8 = inlined_call_operand.vmem [shape: f32[8,16,8], index: 8, kind: output, shape index: {}]
  %s9 = sld [smem:[#allocation0]]
  $region65: #{tpu_custom_call.1} parent=0
    _
  %s11 = ssub.s32 1, %s9
  %s12 = scalar_select 0, %s11, %s9
  loop: start=0, step=1, limit=6
  $region2: #{tpu_custom_call.1} parent=0 // loop_pre_header
    _
  $region3: #{tpu_custom_call.1} parent=0 // loop_header
    %s14 = sphi 0, %s18
    %p15 = scmp.ge.s32.totalorder %s14, 6
    %s24 = sphi 0, %s26
    %s27 = sphi 0, %s24
    %s28 = sphi 0, %s27
    %s44 = sphi 0, %s28
    %s48 = sphi 0, %s48
    %s50 = sphi 0, %s48
    %s51 = sphi 0, %s50
    %s65 = sphi 0, %s51
    %s69 = sphi 0, %s69
    %s71 = sphi 0, %s69
    %s72 = sphi 0, %s71
    %s86 = sphi 0, %s72
    %s90 = sphi 0, %s90
    %s92 = sphi 0, %s90
    %s93 = sphi 0, %s92
    %s107 = sphi 0, %s93
    %s111 = sphi 0, %s111
    %s113 = sphi 0, %s111
    %s114 = sphi 0, %s113
    %s128 = sphi 0, %s114
    %s132 = sphi 0, %s132
    %s134 = sphi 0, %s132
    %s135 = sphi 0, %s134
    %s149 = sphi 0, %s135
    %s153 = sphi 0, %s153
    %s155 = sphi 0, %s153
    %s156 = sphi 0, %s155
    %s170 = sphi 0, %s156
    %s174 = sphi 0, %s174
    %s176 = sphi 0, %s174
    %s177 = sphi 0, %s176
    %s191 = sphi 0, %s177
    %s197 = sphi 0, %s199
    %s200 = sphi 0, %s197
    %s201 = sphi 0, %s200
    %s217 = sphi 0, %s201
  $region4: #{tpu_custom_call.1} parent=0 // loop_header_branch
    %17 = sbr.rel (%p15) target = $region8
  $region5: #{tpu_custom_call.1} parent=0 // loop_body
    %s19 = ssub.s32 %s14, 1
    %s20 = ssub.s32 %s14, 2
    %s21 = sadd.s32 %s14, 1
    %s22 = ssub.s32 %s14, %s21
    %p23 = scmp.eq.s32.totalorder %s22, 0
    %s25 = sadd.s32 %s24, 1
    %s26 = scalar_select %p23, %s24, %s25
    %p29 = pneg %p23
    %p30 = scmp.eq.s32.totalorder %s14, 3
    %p31 = por %p29, %p30
    %p32 = scmp.ne.s32.totalorder %s24, %s27
    %p33 = scmp.eq.s32.totalorder %s14, 0
    %p34 = por %p32, %p33
    %p35 = scmp.ne.s32.totalorder %s24, %s27
    %p36 = scmp.eq.s32.totalorder %s19, 3
    %p37 = por %p35, %p36
    %p38 = scmp.ne.s32.totalorder %s27, %s28
    %p39 = scmp.eq.s32.totalorder %s19, 0
    %p40 = por %p38, %p39
    %p41 = scmp.ne.s32.totalorder %s27, %s28
    %p42 = scmp.eq.s32.totalorder %s20, 3
    %p43 = por %p41, %p42
    %p45 = scmp.ne.s32.totalorder %s28, %s44
    %p46 = scmp.eq.s32.totalorder %s20, 0
    %p47 = por %p45, %p46
    %s49 = sadd.s32 %s48, 1
    %p52 = scmp.eq.s32.totalorder %s14, 3
    %p53 = scmp.ne.s32.totalorder %s48, %s50
    %p54 = scmp.eq.s32.totalorder %s14, 0
    %p55 = por %p53, %p54
    %p56 = scmp.ne.s32.totalorder %s48, %s50
    %p57 = scmp.eq.s32.totalorder %s19, 3
    %p58 = por %p56, %p57
    %p59 = scmp.ne.s32.totalorder %s50, %s51
    %p60 = scmp.eq.s32.totalorder %s19, 0
    %p61 = por %p59, %p60
    %p62 = scmp.ne.s32.totalorder %s50, %s51
    %p63 = scmp.eq.s32.totalorder %s20, 3
    %p64 = por %p62, %p63
    %p66 = scmp.ne.s32.totalorder %s51, %s65
    %p67 = scmp.eq.s32.totalorder %s20, 0
    %p68 = por %p66, %p67
    %s70 = sadd.s32 %s69, 1
    %p73 = scmp.eq.s32.totalorder %s14, 3
    %p74 = scmp.ne.s32.totalorder %s69, %s71
    %p75 = scmp.eq.s32.totalorder %s14, 0
    %p76 = por %p74, %p75
    %p77 = scmp.ne.s32.totalorder %s69, %s71
    %p78 = scmp.eq.s32.totalorder %s19, 3
    %p79 = por %p77, %p78
    %p80 = scmp.ne.s32.totalorder %s71, %s72
    %p81 = scmp.eq.s32.totalorder %s19, 0
    %p82 = por %p80, %p81
    %p83 = scmp.ne.s32.totalorder %s71, %s72
    %p84 = scmp.eq.s32.totalorder %s20, 3
    %p85 = por %p83, %p84
    %p87 = scmp.ne.s32.totalorder %s72, %s86
    %p88 = scmp.eq.s32.totalorder %s20, 0
    %p89 = por %p87, %p88
    %s91 = sadd.s32 %s90, 1
    %p94 = scmp.eq.s32.totalorder %s14, 3
    %p95 = scmp.ne.s32.totalorder %s90, %s92
    %p96 = scmp.eq.s32.totalorder %s14, 0
    %p97 = por %p95, %p96
    %p98 = scmp.ne.s32.totalorder %s90, %s92
    %p99 = scmp.eq.s32.totalorder %s19, 3
    %p100 = por %p98, %p99
    %p101 = scmp.ne.s32.totalorder %s92, %s93
    %p102 = scmp.eq.s32.totalorder %s19, 0
    %p103 = por %p101, %p102
    %p104 = scmp.ne.s32.totalorder %s92, %s93
    %p105 = scmp.eq.s32.totalorder %s20, 3
    %p106 = por %p104, %p105
    %p108 = scmp.ne.s32.totalorder %s93, %s107
    %p109 = scmp.eq.s32.totalorder %s20, 0
    %p110 = por %p108, %p109
    %s112 = sadd.s32 %s111, 1
    %p115 = scmp.eq.s32.totalorder %s14, 3
    %p116 = scmp.ne.s32.totalorder %s111, %s113
    %p117 = scmp.eq.s32.totalorder %s14, 0
    %p118 = por %p116, %p117
    %p119 = scmp.ne.s32.totalorder %s111, %s113
    %p120 = scmp.eq.s32.totalorder %s19, 3
    %p121 = por %p119, %p120
    %p122 = scmp.ne.s32.totalorder %s113, %s114
    %p123 = scmp.eq.s32.totalorder %s19, 0
    %p124 = por %p122, %p123
    %p125 = scmp.ne.s32.totalorder %s113, %s114
    %p126 = scmp.eq.s32.totalorder %s20, 3
    %p127 = por %p125, %p126
    %p129 = scmp.ne.s32.totalorder %s114, %s128
    %p130 = scmp.eq.s32.totalorder %s20, 0
    %p131 = por %p129, %p130
    %s133 = sadd.s32 %s132, 1
    %p136 = scmp.eq.s32.totalorder %s14, 3
    %p137 = scmp.ne.s32.totalorder %s132, %s134
    %p138 = scmp.eq.s32.totalorder %s14, 0
    %p139 = por %p137, %p138
    %p140 = scmp.ne.s32.totalorder %s132, %s134
    %p141 = scmp.eq.s32.totalorder %s19, 3
    %p142 = por %p140, %p141
    %p143 = scmp.ne.s32.totalorder %s134, %s135
    %p144 = scmp.eq.s32.totalorder %s19, 0
    %p145 = por %p143, %p144
    %p146 = scmp.ne.s32.totalorder %s134, %s135
    %p147 = scmp.eq.s32.totalorder %s20, 3
    %p148 = por %p146, %p147
    %p150 = scmp.ne.s32.totalorder %s135, %s149
    %p151 = scmp.eq.s32.totalorder %s20, 0
    %p152 = por %p150, %p151
    %s154 = sadd.s32 %s153, 1
    %p157 = scmp.eq.s32.totalorder %s14, 3
    %p158 = scmp.ne.s32.totalorder %s153, %s155
    %p159 = scmp.eq.s32.totalorder %s14, 0
    %p160 = por %p158, %p159
    %p161 = scmp.ne.s32.totalorder %s153, %s155
    %p162 = scmp.eq.s32.totalorder %s19, 3
    %p163 = por %p161, %p162
    %p164 = scmp.ne.s32.totalorder %s155, %s156
    %p165 = scmp.eq.s32.totalorder %s19, 0
    %p166 = por %p164, %p165
    %p167 = scmp.ne.s32.totalorder %s155, %s156
    %p168 = scmp.eq.s32.totalorder %s20, 3
    %p169 = por %p167, %p168
    %p171 = scmp.ne.s32.totalorder %s156, %s170
    %p172 = scmp.eq.s32.totalorder %s20, 0
    %p173 = por %p171, %p172
    %s175 = sadd.s32 %s174, 1
    %p178 = scmp.eq.s32.totalorder %s14, 3
    %p179 = scmp.ne.s32.totalorder %s174, %s176
    %p180 = scmp.eq.s32.totalorder %s14, 0
    %p181 = por %p179, %p180
    %p182 = scmp.ne.s32.totalorder %s174, %s176
    %p183 = scmp.eq.s32.totalorder %s19, 3
    %p184 = por %p182, %p183
    %p185 = scmp.ne.s32.totalorder %s176, %s177
    %p186 = scmp.eq.s32.totalorder %s19, 0
    %p187 = por %p185, %p186
    %p188 = scmp.ne.s32.totalorder %s176, %s177
    %p189 = scmp.eq.s32.totalorder %s20, 3
    %p190 = por %p188, %p189
    %p192 = scmp.ne.s32.totalorder %s177, %s191
    %p193 = scmp.eq.s32.totalorder %s20, 0
    %p194 = por %p192, %p193
    %s195 = ssub.s32 %s14, %s21
    %p196 = scmp.eq.s32.totalorder %s195, 0
    %s198 = sadd.s32 %s197, 1
    %s199 = scalar_select %p196, %s197, %s198
    %p202 = pneg %p196
    %p203 = scmp.eq.s32.totalorder %s14, 3
    %p204 = por %p202, %p203
    %p205 = scmp.ne.s32.totalorder %s197, %s200
    %p206 = scmp.eq.s32.totalorder %s14, 0
    %p207 = por %p205, %p206
    %p208 = scmp.ne.s32.totalorder %s197, %s200
    %p209 = scmp.eq.s32.totalorder %s19, 3
    %p210 = por %p208, %p209
    %p211 = scmp.ne.s32.totalorder %s200, %s201
    %p212 = scmp.eq.s32.totalorder %s19, 0
    %p213 = por %p211, %p212
    %p214 = scmp.ne.s32.totalorder %s200, %s201
    %p215 = scmp.eq.s32.totalorder %s20, 3
    %p216 = por %p214, %p215
    %p218 = scmp.ne.s32.totalorder %s201, %s217
    %p219 = scmp.eq.s32.totalorder %s20, 0
    %p220 = por %p218, %p219
    %p221 = scmp.le.s32.totalorder 1, %s14
    %p222 = scmp.lt.s32.totalorder %s14, 5
    %p223 = pnand %p221, %p222
    %p224 = pneg %p223
    // Predicated region
    $region9: #{tpu_custom_call.1} parent=5 // pred_check
      _
    $region10: #{tpu_custom_call.1} parent=5 // pred_check_branch
      %226 = sbr.rel (%p223) target = $region12
    $region11: #{tpu_custom_call.1} parent=5 // pred_region
      %s227 = ssub.s32 %s14, 1
      // Predicated region
      $region13: #{tpu_custom_call.1} parent=11 // pred_check
        %p228 = pneg %p61
      $region14: #{tpu_custom_call.1} parent=11 // pred_check_branch
        %230 = sbr.rel (%p228) target = $region16
      $region15: #{tpu_custom_call.1} parent=11 // pred_region
        _
      $region16: #{tpu_custom_call.1} parent=11 // pred_fallthru
        _
      // Predicated region
      $region17: #{tpu_custom_call.1} parent=11 // pred_check
        %p231 = pneg %p82
      $region18: #{tpu_custom_call.1} parent=11 // pred_check_branch
        %233 = sbr.rel (%p231) target = $region20
      $region19: #{tpu_custom_call.1} parent=11 // pred_region
        _
      $region20: #{tpu_custom_call.1} parent=11 // pred_fallthru
        _
      // Predicated region
      $region21: #{tpu_custom_call.1} parent=11 // pred_check
        %p234 = pneg %p103
      $region22: #{tpu_custom_call.1} parent=11 // pred_check_branch
        %236 = sbr.rel (%p234) target = $region24
      $region23: #{tpu_custom_call.1} parent=11 // pred_region
        _
      $region24: #{tpu_custom_call.1} parent=11 // pred_fallthru
        _
      // Predicated region
      $region25: #{tpu_custom_call.1} parent=11 // pred_check
        %p237 = pneg %p124
      $region26: #{tpu_custom_call.1} parent=11 // pred_check_branch
        %239 = sbr.rel (%p237) target = $region28
      $region27: #{tpu_custom_call.1} parent=11 // pred_region
        _
      $region28: #{tpu_custom_call.1} parent=11 // pred_fallthru
        _
      // Predicated region
      $region29: #{tpu_custom_call.1} parent=11 // pred_check
        %p240 = pneg %p145
      $region30: #{tpu_custom_call.1} parent=11 // pred_check_branch
        %242 = sbr.rel (%p240) target = $region32
      $region31: #{tpu_custom_call.1} parent=11 // pred_region
        _
      $region32: #{tpu_custom_call.1} parent=11 // pred_fallthru
        _
      // Predicated region
      $region33: #{tpu_custom_call.1} parent=11 // pred_check
        %p243 = pneg %p166
      $region34: #{tpu_custom_call.1} parent=11 // pred_check_branch
        %245 = sbr.rel (%p243) target = $region36
      $region35: #{tpu_custom_call.1} parent=11 // pred_region
        _
      $region36: #{tpu_custom_call.1} parent=11 // pred_fallthru
        _
      // Predicated region
      $region37: #{tpu_custom_call.1} parent=11 // pred_check
        %p246 = pneg %p187
      $region38: #{tpu_custom_call.1} parent=11 // pred_check_branch
        %248 = sbr.rel (%p246) target = $region40
      $region39: #{tpu_custom_call.1} parent=11 // pred_region
        _
      $region40: #{tpu_custom_call.1} parent=11 // pred_fallthru
        _
    $region12: #{tpu_custom_call.1} parent=5 // pred_fallthru
      _
    %p249 = scmp.lt.s32.totalorder %s14, 4
    // Predicated region
    $region41: #{tpu_custom_call.1} parent=5 // pred_check
      %p250 = pneg %p249
    $region42: #{tpu_custom_call.1} parent=5 // pred_check_branch
      %252 = sbr.rel (%p250) target = $region44
    $region43: #{tpu_custom_call.1} parent=5 // pred_region
      // Predicated region
      $region45: #{tpu_custom_call.1} parent=43 // pred_check
        %p253 = pneg %p34
      $region46: #{tpu_custom_call.1} parent=43 // pred_check_branch
        %255 = sbr.rel (%p253) target = $region48
      $region47: #{tpu_custom_call.1} parent=43 // pred_region
        %s256 = smul.u32 2, %s14
        %p257 = scmp.lt.s32.totalorder %s256, 7
        %s258 = scalar_select %p257, %s256, 7
        %s259 = smul.addr %s258, 2
        %s260 = smul.addr %s259, 8
        %s261 = scalar_lea.vmem %s0, %s260
        %s262 = smul.u32 2, %s14
      $region48: #{tpu_custom_call.1} parent=43 // pred_fallthru
        _
    $region44: #{tpu_custom_call.1} parent=5 // pred_fallthru
      _
    %p263 = scmp.le.s32.totalorder 1, %s14
    %p264 = scmp.lt.s32.totalorder %s14, 5
    %p265 = pnand %p263, %p264
    %p266 = pneg %p265
    // Predicated region
    $region49: #{tpu_custom_call.1} parent=5 // pred_check
      _
    $region50: #{tpu_custom_call.1} parent=5 // pred_check_branch
      %268 = sbr.rel (%p265) target = $region52
    $region51: #{tpu_custom_call.1} parent=5 // pred_region
      %s269 = ssub.s32 %s14, 1
      %s270 = smul.u32 2, %s19
      %p271 = scmp.lt.s32.totalorder %s270, 7
      %s272 = scalar_select %p271, %s270, 7
      %s273 = smul.addr %s272, 2
      %s274 = smul.addr %s273, 8
      %s275 = scalar_lea.vmem %s0, %s274
      %p276 = pneg %p40
      %p277 = pneg %p37
      %p278 = pneg %p61
      %p279 = pneg %p58
      %p280 = pneg %p82
      %p281 = pneg %p79
      %p282 = pneg %p103
      %p283 = pneg %p100
      %p284 = pneg %p124
      %p285 = pneg %p121
      %p286 = pneg %p145
      %p287 = pneg %p142
      %p288 = pneg %p166
      %p289 = pneg %p163
      %p290 = pneg %p187
      %p291 = pneg %p184
      %p292 = pneg %p213
      %p293 = pneg %p210
      %s294 = smul.u32 2, %s19
      %p295 = scmp.lt.s32.totalorder %s294, 7
      %s296 = scalar_select %p295, %s294, 7
      %s297 = smul.addr %s296, 2
      %s298 = smul.addr %s297, 8
      %s299 = scalar_lea.vmem %s8, %s298
      %s300 = smul.u32 2, %s19
      %p301 = scmp.lt.s32.totalorder %s300, 7
      %s302 = scalar_select %p301, %s300, 7
      %s303 = smul.addr %s302, 2
      %s304 = smul.addr %s303, 8
      %s305 = scalar_lea.vmem %s0, %s304
      %s306 = smul.u32 2, %s19
      %s307 = smul.u32 2, %s19
      %p308 = scmp.lt.s32.totalorder %s307, 7
      %s309 = scalar_select %p308, %s307, 7
      %s310 = smul.addr %s309, 2
      %s311 = smul.addr %s310, 8
      %s312 = scalar_lea.vmem %s8, %s311
      %s313 = smul.u32 2, %s19
      %vm315 = vcmask 57344
      %vm316 = vsmask.f32 256
      %vm317 = vmand %vm315, %vm316
      %v318 = vld [vmem:[#allocation2] sm:$0x1]
      %v319 = vsel %vm317, 0, %v318
      %320 = vst [vmem:[#allocation2] sm:$0x1] %v319
      %v321 = vld [vmem:[#allocation2 + $0xc] sm:$0x1]
      %v322 = vsel %vm317, 0, %v321
      %323 = vst [vmem:[#allocation2 + $0xc] sm:$0x1] %v322
      %vm324 = vsmask.f32 7938
      %vm325 = vmand %vm315, %vm324
      %v326 = vld [vmem:[#allocation2 + $0x8] sm:$0x1]
      %v327 = vsel %vm325, 0, %v326
      %328 = vst [vmem:[#allocation2 + $0x8] sm:$0x1] %v327
      %v329 = vld [vmem:[#allocation2 + $0x14] sm:$0x1]
      %v330 = vsel %vm325, 0, %v329
      %331 = vst [vmem:[#allocation2 + $0x14] sm:$0x1] %v330
      %v332 = vld [vmem:[%s305] sm:$0xff]
      %v333 = vld [vmem:[%s305 + $0x8] sm:$0xff]
      %v334 = vld [vmem:[%s305 + $0x10] sm:$0xff]
      %v335 = vld [vmem:[%s305 + $0x18] sm:$0xff]
      %v336 = vld [vmem:[%s1] sm:$0x1]
      %v338 = vlaneseq
      %v339 = vshrl.u32 %v338, 7
      %v340 = vsub.s32 0, %v339
      %v341 = vrot.slane %v336, %v340
      %v343 = vmul.f32 %v332, %v341
      %v344 = vmul.f32 %v333, %v341
      %v345 = vmul.f32 %v334, %v341
      %v346 = vmul.f32 %v335, %v341
      %v347 = vld [vmem:[%s2] sm:$0x1]
      %v349 = vlaneseq
      %v350 = vshrl.u32 %v349, 7
      %v351 = vsub.s32 0, %v350
      %v352 = vrot.slane %v347, %v351
      %v354 = vadd.f32 %v343, %v352
      %v355 = vadd.f32 %v344, %v352
      %v356 = vadd.f32 %v345, %v352
      %v357 = vadd.f32 %v346, %v352
      %v358 = vmax.f32 %v354, 0.0
      %v359 = vmax.f32 %v355, 0.0
      %v360 = vmax.f32 %v356, 0.0
      %v361 = vmax.f32 %v357, 0.0
      %v362 = vpack.c.bf16 %v359, %v358
      %v363 = vpack.c.bf16 %v361, %v360
      %v366 = vunpack.c.l.b16 %v362
      %v367 = vunpack.c.h.b16 %v362
      %v368 = vunpack.c.l.b16 %v363
      %v369 = vunpack.c.h.b16 %v363
      %v370 = vpack.c.b16 %v366, %v366
      %v371 = vpack.c.b16 %v367, %v367
      %v372 = vpack.c.b16 %v368, %v368
      %v373 = vpack.c.b16 %v369, %v369
      %vm374 = vsmask.f32 4368
      %vm375 = vmor %vm316, %vm374
      %v377 = vshrl.u32 %v370, 16
      %v379 = vrot.slane %v377, 7
      %v380 = vshll.u32 %v370, 16
      %v382 = vor.u32 %v379, %v380
      %v383 = vrot.slane %v379, 4
      %v385 = vshrl.u32 %v371, 16
      %v387 = vrot.slane %v385, 7
      %v388 = vshll.u32 %v371, 16
      %v390 = vor.u32 %v387, %v388
      %v391 = vsel %vm375, %v383, %v390
      %v392 = vrot.slane %v387, 4
      %v394 = vshrl.u32 %v372, 16
      %v396 = vrot.slane %v394, 7
      %v397 = vshll.u32 %v372, 16
      %v399 = vor.u32 %v396, %v397
      %v400 = vrot.slane %v396, 4
      %v402 = vshrl.u32 %v373, 16
      %v404 = vrot.slane %v402, 7
      %v405 = vshll.u32 %v373, 16
      %v407 = vor.u32 %v404, %v405
      %v408 = vsel %vm375, %v400, %v407
      %v409 = vrot.slane %v404, 4
      %vm416 = vcmask 60416
      %vm417 = vmand %vm416, %vm324
      %v418 = vld [vmem:[#allocation2] sm:$0xf]
      %v419 = vsel %vm417, %v382, %v418
      %420 = vst [vmem:[#allocation2] sm:$0xf] %v419
      %vm421 = vcmask 60416
      %422 = vst.msk [vmem:[#allocation2 + $0x4] sm:$0xf] %vm421, %v391
      %v423 = vld [vmem:[#allocation2 + $0x8] sm:$0x1]
      %v424 = vsel %vm317, %v392, %v423
      %425 = vst [vmem:[#allocation2 + $0x8] sm:$0x1] %v424
      %v426 = vld [vmem:[#allocation2 + $0xc] sm:$0xf]
      %v427 = vsel %vm417, %v399, %v426
      %428 = vst [vmem:[#allocation2 + $0xc] sm:$0xf] %v427
      %429 = vst.msk [vmem:[#allocation2 + $0x10] sm:$0xf] %vm421, %v408
      %v430 = vld [vmem:[#allocation2 + $0x14] sm:$0x1]
      %v431 = vsel %vm317, %v409, %v430
      %432 = vst [vmem:[#allocation2 + $0x14] sm:$0x1] %v431
      %v433 = vld [vmem:[#allocation2] sm:$0xf]
      %v434 = vld [vmem:[#allocation2 + $0x4] sm:$0xf]
      %v435 = vld [vmem:[#allocation2 + $0xc] sm:$0xf]
      %v436 = vld [vmem:[#allocation2 + $0x10] sm:$0xf]
      %v437 = vld [vmem:[%s3] sm:$0xf]
      %v438 = vld [vmem:[#allocation2 + $0x8] sm:$0x1]
      %v439 = vld [vmem:[#allocation2 + $0x14] sm:$0x1]
      %vm440 = vsmask.f32 3328
      %vm441 = vsmask.f32 7440
      %vm442 = vmor %vm440, %vm441
      %v444 = vshrl.u32 %v433, 16
      %v446 = vrot.slane %v444, 4
      %v447 = vshll.u32 %v433, 16
      %v449 = vrot.slane %v447, 5
      %v450 = vor.u32 %v446, %v449
      %v451 = vrot.slane %v450, 4
      %v453 = vshll.u32 %v434, 16
      %v455 = vrot.slane %v453, 5
      %v456 = vsel %vm442, %v451, %v455
      %v457 = vshrl.u32 %v434, 16
      %v459 = vrot.slane %v457, 4
      %v460 = vor.u32 %v459, %v455
      %v461 = vrot.slane %v460, 4
      %v463 = vshll.u32 %v438, 16
      %v465 = vrot.slane %v463, 5
      %v466 = vsel %vm442, %v461, %v465
      %v468 = vshrl.u32 %v435, 16
      %v470 = vrot.slane %v468, 4
      %v471 = vshll.u32 %v435, 16
      %v473 = vrot.slane %v471, 5
      %v474 = vor.u32 %v470, %v473
      %v475 = vrot.slane %v474, 4
      %v477 = vshll.u32 %v436, 16
      %v479 = vrot.slane %v477, 5
      %v480 = vsel %vm442, %v475, %v479
      %v481 = vshrl.u32 %v436, 16
      %v483 = vrot.slane %v481, 4
      %v484 = vor.u32 %v483, %v479
      %v485 = vrot.slane %v484, 4
      %v487 = vshll.u32 %v439, 16
      %v489 = vrot.slane %v487, 5
      %v490 = vsel %vm442, %v485, %v489
      %v491 = vld [vmem:[%s3 + $0x4] sm:$0xf]
      %v492 = vunpack.c.l.b16 %v456
      %v493 = vunpack.c.l.b16 %v466
      %v494 = vunpack.c.l.b16 %v480
      %v495 = vunpack.c.l.b16 %v490
      %v496 = vpack.c.b16 %v493, %v492
      %v497 = vpack.c.b16 %v495, %v494
      %vm498 = vcmask 64512
      %v500 = vsel %vm498, %v496, 0
      %v503 = vsel %vm498, %v497, 0
      %vm505 = vcmask 1043456
      %v507 = vsel %vm505, %v491, 0
      %509 = vmatprep.subr.bf16.mxu0 0
      %510 = vmatpush1.bf16.msra.mxu0 0
      %511 = vmatprep.subr.bf16.mxu0 0
      %512 = vmatpush1.bf16.msra.mxu0 0
      %513 = vmatprep.subr.bf16.mxu0 0
      %514 = vmatpush1.bf16.msra.mxu0 0
      %515 = vmatprep.subr.bf16.mxu0 0
      %516 = vmatpush1.bf16.msra.mxu0 0
      %517 = vmatprep.subr.bf16.mxu0 0
      %518 = vmatpush1.bf16.msra.mxu0 0
      %519 = vmatprep.subr.bf16.mxu0 0
      %520 = vmatpush1.bf16.msra.mxu0 0
      %521 = vmatprep.subr.bf16.mxu0 0
      %522 = vmatpush1.bf16.msra.mxu0 0
      %523 = vmatprep.subr.bf16.mxu0 0
      %524 = vmatpush1.bf16.msra.mxu0 %v507
      %525 = vmatprep.subr.bf16.mxu0 0
      %526 = vmatpush2.bf16.msra.mxu0 0
      %527 = vmatprep.subr.bf16.mxu0 0
      %528 = vmatpush2.bf16.msra.mxu0 0
      %529 = vmatprep.subr.bf16.mxu0 0
      %530 = vmatpush2.bf16.msra.mxu0 0
      %531 = vmatprep.subr.bf16.mxu0 0
      %532 = vmatpush2.bf16.msra.mxu0 0
      %533 = vmatprep.subr.bf16.mxu0 0
      %534 = vmatpush2.bf16.msra.mxu0 0
      %535 = vmatprep.subr.bf16.mxu0 0
      %536 = vmatpush2.bf16.msra.mxu0 0
      %537 = vmatprep.subr.bf16.mxu0 0
      %538 = vmatpush2.bf16.msra.mxu0 0
      %539 = vmatprep.subr.bf16.mxu0 0
      %540 = vmatpush2.bf16.msra.mxu0 0
      %541 = vmatprep.mubr.bf16.mxu0 0
      %542 = vmatmul.mubr.bf16.gmra.mxu0 %v500
      %v543 = vpop.f32.mrf.mxu0
      %v544 = vadd.f32 0.0, %v543
      %v545 = vpop.f32.mrf.mxu0
      %v546 = vpop.f32.mrf.mxu0
      %v547 = vadd.f32 0.0, %v546
      %v548 = vpop.f32.mrf.mxu0
      %549 = vmatprep.mubr.bf16.mxu0 0
      %550 = vmatmul.mubr.bf16.gmra.mxu0 %v503
      %v551 = vpop.f32.mrf.mxu0
      %v552 = vadd.f32 0.0, %v551
      %v553 = vpop.f32.mrf.mxu0
      %v554 = vpop.f32.mrf.mxu0
      %v555 = vadd.f32 0.0, %v554
      %v556 = vpop.f32.mrf.mxu0
      %557 = vdwg.mxu0
      %v562 = vunpack.c.l.b16 %v433
      %v563 = vunpack.c.l.b16 %v434
      %v564 = vunpack.c.l.b16 %v435
      %v565 = vunpack.c.l.b16 %v436
      %v566 = vpack.c.b16 %v563, %v562
      %v567 = vpack.c.b16 %v565, %v564
      %v569 = vsel %vm498, %v566, 0
      %v572 = vsel %vm498, %v567, 0
      %v575 = vsel %vm505, %v437, 0
      %577 = vmatprep.subr.bf16.mxu0 0
      %578 = vmatpush1.bf16.msra.mxu0 0
      %579 = vmatprep.subr.bf16.mxu0 0
      %580 = vmatpush1.bf16.msra.mxu0 0
      %581 = vmatprep.subr.bf16.mxu0 0
      %582 = vmatpush1.bf16.msra.mxu0 0
      %583 = vmatprep.subr.bf16.mxu0 0
      %584 = vmatpush1.bf16.msra.mxu0 0
      %585 = vmatprep.subr.bf16.mxu0 0
      %586 = vmatpush1.bf16.msra.mxu0 0
      %587 = vmatprep.subr.bf16.mxu0 0
      %588 = vmatpush1.bf16.msra.mxu0 0
      %589 = vmatprep.subr.bf16.mxu0 0
      %590 = vmatpush1.bf16.msra.mxu0 0
      %591 = vmatprep.subr.bf16.mxu0 0
      %592 = vmatpush1.bf16.msra.mxu0 %v575
      %593 = vmatprep.subr.bf16.mxu0 0
      %594 = vmatpush2.bf16.msra.mxu0 0
      %595 = vmatprep.subr.bf16.mxu0 0
      %596 = vmatpush2.bf16.msra.mxu0 0
      %597 = vmatprep.subr.bf16.mxu0 0
      %598 = vmatpush2.bf16.msra.mxu0 0
      %599 = vmatprep.subr.bf16.mxu0 0
      %600 = vmatpush2.bf16.msra.mxu0 0
      %601 = vmatprep.subr.bf16.mxu0 0
      %602 = vmatpush2.bf16.msra.mxu0 0
      %603 = vmatprep.subr.bf16.mxu0 0
      %604 = vmatpush2.bf16.msra.mxu0 0
      %605 = vmatprep.subr.bf16.mxu0 0
      %606 = vmatpush2.bf16.msra.mxu0 0
      %607 = vmatprep.subr.bf16.mxu0 0
      %608 = vmatpush2.bf16.msra.mxu0 0
      %609 = vmatprep.mubr.bf16.mxu0 0
      %610 = vmatmul.mubr.bf16.gmra.mxu0 %v569
      %v611 = vpop.f32.mrf.mxu0
      %v612 = vadd.f32 %v544, %v611
      %v613 = vpop.f32.mrf.mxu0
      %v614 = vpop.f32.mrf.mxu0
      %v615 = vadd.f32 %v547, %v614
      %v616 = vpop.f32.mrf.mxu0
      %617 = vmatprep.mubr.bf16.mxu0 0
      %618 = vmatmul.mubr.bf16.gmra.mxu0 %v572
      %v619 = vpop.f32.mrf.mxu0
      %v620 = vadd.f32 %v552, %v619
      %v621 = vpop.f32.mrf.mxu0
      %v622 = vpop.f32.mrf.mxu0
      %v623 = vadd.f32 %v555, %v622
      %v624 = vpop.f32.mrf.mxu0
      %625 = vdwg.mxu0
      %v626 = vld [vmem:[#allocation2] sm:$0xe]
      %v627 = vld [vmem:[#allocation2 + $0xc] sm:$0xe]
      %vm632 = vcmask 1042432
      %vm633 = vcmask 1046532
      %vm634 = vmor %vm632, %vm633
      %v635 = vrot.slane %v626, 5
      %v636 = vrot.slane %v635, 4
      %v637 = vrot.slane %v434, 5
      %v638 = vsel %vm634, %v636, %v637
      %v639 = vrot.slane %v637, 4
      %v640 = vrot.slane %v438, 5
      %v641 = vsel %vm634, %v639, %v640
      %v642 = vrot.slane %v627, 5
      %v643 = vrot.slane %v642, 4
      %v644 = vrot.slane %v436, 5
      %v645 = vsel %vm634, %v643, %v644
      %v646 = vrot.slane %v644, 4
      %v647 = vrot.slane %v439, 5
      %v648 = vsel %vm634, %v646, %v647
      %v649 = vld [vmem:[%s3 + $0x8] sm:$0xf]
      %v650 = vunpack.c.l.b16 %v638
      %v651 = vunpack.c.l.b16 %v641
      %v652 = vunpack.c.l.b16 %v645
      %v653 = vunpack.c.l.b16 %v648
      %v654 = vpack.c.b16 %v651, %v650
      %v655 = vpack.c.b16 %v653, %v652
      %v657 = vsel %vm498, %v654, 0
      %v660 = vsel %vm498, %v655, 0
      %v663 = vsel %vm505, %v649, 0
      %665 = vmatprep.subr.bf16.mxu0 0
      %666 = vmatpush1.bf16.msra.mxu0 0
      %667 = vmatprep.subr.bf16.mxu0 0
      %668 = vmatpush1.bf16.msra.mxu0 0
      %669 = vmatprep.subr.bf16.mxu0 0
      %670 = vmatpush1.bf16.msra.mxu0 0
      %671 = vmatprep.subr.bf16.mxu0 0
      %672 = vmatpush1.bf16.msra.mxu0 0
      %673 = vmatprep.subr.bf16.mxu0 0
      %674 = vmatpush1.bf16.msra.mxu0 0
      %675 = vmatprep.subr.bf16.mxu0 0
      %676 = vmatpush1.bf16.msra.mxu0 0
      %677 = vmatprep.subr.bf16.mxu0 0
      %678 = vmatpush1.bf16.msra.mxu0 0
      %679 = vmatprep.subr.bf16.mxu0 0
      %680 = vmatpush1.bf16.msra.mxu0 %v663
      %681 = vmatprep.subr.bf16.mxu0 0
      %682 = vmatpush2.bf16.msra.mxu0 0
      %683 = vmatprep.subr.bf16.mxu0 0
      %684 = vmatpush2.bf16.msra.mxu0 0
      %685 = vmatprep.subr.bf16.mxu0 0
      %686 = vmatpush2.bf16.msra.mxu0 0
      %687 = vmatprep.subr.bf16.mxu0 0
      %688 = vmatpush2.bf16.msra.mxu0 0
      %689 = vmatprep.subr.bf16.mxu0 0
      %690 = vmatpush2.bf16.msra.mxu0 0
      %691 = vmatprep.subr.bf16.mxu0 0
      %692 = vmatpush2.bf16.msra.mxu0 0
      %693 = vmatprep.subr.bf16.mxu0 0
      %694 = vmatpush2.bf16.msra.mxu0 0
      %695 = vmatprep.subr.bf16.mxu0 0
      %696 = vmatpush2.bf16.msra.mxu0 0
      %697 = vmatprep.mubr.bf16.mxu0 0
      %698 = vmatmul.mubr.bf16.gmra.mxu0 %v657
      %v699 = vpop.f32.mrf.mxu0
      %v700 = vadd.f32 0.0, %v699
      %v701 = vpop.f32.mrf.mxu0
      %v702 = vpop.f32.mrf.mxu0
      %v703 = vadd.f32 0.0, %v702
      %v704 = vpop.f32.mrf.mxu0
      %705 = vmatprep.mubr.bf16.mxu0 0
      %706 = vmatmul.mubr.bf16.gmra.mxu0 %v660
      %v707 = vpop.f32.mrf.mxu0
      %v708 = vadd.f32 0.0, %v707
      %v709 = vpop.f32.mrf.mxu0
      %v710 = vpop.f32.mrf.mxu0
      %v711 = vadd.f32 0.0, %v710
      %v712 = vpop.f32.mrf.mxu0
      %713 = vdwg.mxu0
      %v714 = vadd.f32 %v612, %v700
      %v715 = vadd.f32 %v615, %v703
      %v716 = vadd.f32 %v620, %v708
      %v717 = vadd.f32 %v623, %v711
      %v718 = vld [vmem:[%s4] sm:$0x1]
      %v720 = vlaneseq
      %v721 = vshrl.u32 %v720, 7
      %v722 = vsub.s32 0, %v721
      %v723 = vrot.slane %v718, %v722
      %v725 = vmul.f32 %v714, %v723
      %v726 = vmul.f32 %v715, %v723
      %v727 = vmul.f32 %v716, %v723
      %v728 = vmul.f32 %v717, %v723
      %v729 = vld [vmem:[%s5] sm:$0x1]
      %v731 = vlaneseq
      %v732 = vshrl.u32 %v731, 7
      %v733 = vsub.s32 0, %v732
      %v734 = vrot.slane %v729, %v733
      %v736 = vadd.f32 %v725, %v734
      %v737 = vadd.f32 %v726, %v734
      %v738 = vadd.f32 %v727, %v734
      %v739 = vadd.f32 %v728, %v734
      %v740 = vmax.f32 %v736, 0.0
      %v741 = vmax.f32 %v737, 0.0
      %v742 = vmax.f32 %v738, 0.0
      %v743 = vmax.f32 %v739, 0.0
      %v744 = vpack.c.bf16 %v741, %v740
      %v745 = vpack.c.bf16 %v743, %v742
      %v748 = vunpack.c.l.b16 %v744
      %v749 = vunpack.c.h.b16 %v744
      %v750 = vunpack.c.l.b16 %v745
      %v751 = vunpack.c.h.b16 %v745
      %v752 = vpack.c.b16 %v748, %v748
      %v753 = vpack.c.b16 %v749, %v749
      %v754 = vpack.c.b16 %v750, %v750
      %v755 = vpack.c.b16 %v751, %v751
      %v757 = vshrl.u32 %v752, 16
      %v759 = vrot.slane %v757, 7
      %v760 = vshll.u32 %v752, 16
      %v762 = vor.u32 %v759, %v760
      %v763 = vrot.slane %v759, 4
      %v765 = vshrl.u32 %v753, 16
      %v767 = vrot.slane %v765, 7
      %v768 = vshll.u32 %v753, 16
      %v770 = vor.u32 %v767, %v768
      %v771 = vsel %vm375, %v763, %v770
      %v772 = vrot.slane %v767, 4
      %v774 = vshrl.u32 %v754, 16
      %v776 = vrot.slane %v774, 7
      %v777 = vshll.u32 %v754, 16
      %v779 = vor.u32 %v776, %v777
      %v780 = vrot.slane %v776, 4
      %v782 = vshrl.u32 %v755, 16
      %v784 = vrot.slane %v782, 7
      %v785 = vshll.u32 %v755, 16
      %v787 = vor.u32 %v784, %v785
      %v788 = vsel %vm375, %v780, %v787
      %v789 = vrot.slane %v784, 4
      %v796 = vsel %vm417, %v762, %v433
      %797 = vst [vmem:[#allocation2] sm:$0xf] %v796
      %798 = vst.msk [vmem:[#allocation2 + $0x4] sm:$0xf] %vm421, %v771
      %v799 = vld [vmem:[#allocation2 + $0x8] sm:$0x1]
      %v800 = vsel %vm317, %v772, %v799
      %801 = vst [vmem:[#allocation2 + $0x8] sm:$0x1] %v800
      %v802 = vld [vmem:[#allocation2 + $0xc] sm:$0xf]
      %v803 = vsel %vm417, %v779, %v802
      %804 = vst [vmem:[#allocation2 + $0xc] sm:$0xf] %v803
      %805 = vst.msk [vmem:[#allocation2 + $0x10] sm:$0xf] %vm421, %v788
      %v806 = vld [vmem:[#allocation2 + $0x14] sm:$0x1]
      %v807 = vsel %vm317, %v789, %v806
      %808 = vst [vmem:[#allocation2 + $0x14] sm:$0x1] %v807
      %v809 = vld [vmem:[%s7] sm:$0x1]
      %v810 = vld [vmem:[#allocation2] sm:$0xf]
      %v811 = vld [vmem:[#allocation2 + $0x4] sm:$0xf]
      %v812 = vld [vmem:[#allocation2 + $0xc] sm:$0xf]
      %v813 = vld [vmem:[#allocation2 + $0x10] sm:$0xf]
      %v814 = vld [vmem:[%s6] sm:$0xf]
      %v815 = vld [vmem:[#allocation2 + $0x8] sm:$0x1]
      %v816 = vld [vmem:[#allocation2 + $0x14] sm:$0x1]
      %v818 = vshrl.u32 %v810, 16
      %v820 = vrot.slane %v818, 4
      %v821 = vshll.u32 %v810, 16
      %v823 = vrot.slane %v821, 5
      %v824 = vor.u32 %v820, %v823
      %v825 = vrot.slane %v824, 4
      %v827 = vshll.u32 %v811, 16
      %v829 = vrot.slane %v827, 5
      %v830 = vsel %vm442, %v825, %v829
      %v831 = vshrl.u32 %v811, 16
      %v833 = vrot.slane %v831, 4
      %v834 = vor.u32 %v833, %v829
      %v835 = vrot.slane %v834, 4
      %v837 = vshll.u32 %v815, 16
      %v839 = vrot.slane %v837, 5
      %v840 = vsel %vm442, %v835, %v839
      %v842 = vshrl.u32 %v812, 16
      %v844 = vrot.slane %v842, 4
      %v845 = vshll.u32 %v812, 16
      %v847 = vrot.slane %v845, 5
      %v848 = vor.u32 %v844, %v847
      %v849 = vrot.slane %v848, 4
      %v851 = vshll.u32 %v813, 16
      %v853 = vrot.slane %v851, 5
      %v854 = vsel %vm442, %v849, %v853
      %v855 = vshrl.u32 %v813, 16
      %v857 = vrot.slane %v855, 4
      %v858 = vor.u32 %v857, %v853
      %v859 = vrot.slane %v858, 4
      %v861 = vshll.u32 %v816, 16
      %v863 = vrot.slane %v861, 5
      %v864 = vsel %vm442, %v859, %v863
      %v865 = vld [vmem:[%s6 + $0x4] sm:$0xf]
      %v866 = vunpack.c.l.b16 %v830
      %v867 = vunpack.c.l.b16 %v840
      %v868 = vunpack.c.l.b16 %v854
      %v869 = vunpack.c.l.b16 %v864
      %v870 = vpack.c.b16 %v867, %v866
      %v871 = vpack.c.b16 %v869, %v868
      %v873 = vsel %vm498, %v870, 0
      %v876 = vsel %vm498, %v871, 0
      %v879 = vsel %vm505, %v865, 0
      %881 = vmatprep.subr.bf16.mxu0 0
      %882 = vmatpush1.bf16.msra.mxu0 0
      %883 = vmatprep.subr.bf16.mxu0 0
      %884 = vmatpush1.bf16.msra.mxu0 0
      %885 = vmatprep.subr.bf16.mxu0 0
      %886 = vmatpush1.bf16.msra.mxu0 0
      %887 = vmatprep.subr.bf16.mxu0 0
      %888 = vmatpush1.bf16.msra.mxu0 0
      %889 = vmatprep.subr.bf16.mxu0 0
      %890 = vmatpush1.bf16.msra.mxu0 0
      %891 = vmatprep.subr.bf16.mxu0 0
      %892 = vmatpush1.bf16.msra.mxu0 0
      %893 = vmatprep.subr.bf16.mxu0 0
      %894 = vmatpush1.bf16.msra.mxu0 0
      %895 = vmatprep.subr.bf16.mxu0 0
      %896 = vmatpush1.bf16.msra.mxu0 %v879
      %897 = vmatprep.subr.bf16.mxu0 0
      %898 = vmatpush2.bf16.msra.mxu0 0
      %899 = vmatprep.subr.bf16.mxu0 0
      %900 = vmatpush2.bf16.msra.mxu0 0
      %901 = vmatprep.subr.bf16.mxu0 0
      %902 = vmatpush2.bf16.msra.mxu0 0
      %903 = vmatprep.subr.bf16.mxu0 0
      %904 = vmatpush2.bf16.msra.mxu0 0
      %905 = vmatprep.subr.bf16.mxu0 0
      %906 = vmatpush2.bf16.msra.mxu0 0
      %907 = vmatprep.subr.bf16.mxu0 0
      %908 = vmatpush2.bf16.msra.mxu0 0
      %909 = vmatprep.subr.bf16.mxu0 0
      %910 = vmatpush2.bf16.msra.mxu0 0
      %911 = vmatprep.subr.bf16.mxu0 0
      %912 = vmatpush2.bf16.msra.mxu0 0
      %913 = vmatprep.mubr.bf16.mxu0 0
      %914 = vmatmul.mubr.bf16.gmra.mxu0 %v873
      %v915 = vpop.f32.mrf.mxu0
      %v916 = vadd.f32 0.0, %v915
      %v917 = vpop.f32.mrf.mxu0
      %v918 = vpop.f32.mrf.mxu0
      %v919 = vadd.f32 0.0, %v918
      %v920 = vpop.f32.mrf.mxu0
      %921 = vmatprep.mubr.bf16.mxu0 0
      %922 = vmatmul.mubr.bf16.gmra.mxu0 %v876
      %v923 = vpop.f32.mrf.mxu0
      %v924 = vadd.f32 0.0, %v923
      %v925 = vpop.f32.mrf.mxu0
      %v926 = vpop.f32.mrf.mxu0
      %v927 = vadd.f32 0.0, %v926
      %v928 = vpop.f32.mrf.mxu0
      %929 = vdwg.mxu0
      %v934 = vunpack.c.l.b16 %v810
      %v935 = vunpack.c.l.b16 %v811
      %v936 = vunpack.c.l.b16 %v812
      %v937 = vunpack.c.l.b16 %v813
      %v938 = vpack.c.b16 %v935, %v934
      %v939 = vpack.c.b16 %v937, %v936
      %v941 = vsel %vm498, %v938, 0
      %v944 = vsel %vm498, %v939, 0
      %v947 = vsel %vm505, %v814, 0
      %949 = vmatprep.subr.bf16.mxu0 0
      %950 = vmatpush1.bf16.msra.mxu0 0
      %951 = vmatprep.subr.bf16.mxu0 0
      %952 = vmatpush1.bf16.msra.mxu0 0
      %953 = vmatprep.subr.bf16.mxu0 0
      %954 = vmatpush1.bf16.msra.mxu0 0
      %955 = vmatprep.subr.bf16.mxu0 0
      %956 = vmatpush1.bf16.msra.mxu0 0
      %957 = vmatprep.subr.bf16.mxu0 0
      %958 = vmatpush1.bf16.msra.mxu0 0
      %959 = vmatprep.subr.bf16.mxu0 0
      %960 = vmatpush1.bf16.msra.mxu0 0
      %961 = vmatprep.subr.bf16.mxu0 0
      %962 = vmatpush1.bf16.msra.mxu0 0
      %963 = vmatprep.subr.bf16.mxu0 0
      %964 = vmatpush1.bf16.msra.mxu0 %v947
      %965 = vmatprep.subr.bf16.mxu0 0
      %966 = vmatpush2.bf16.msra.mxu0 0
      %967 = vmatprep.subr.bf16.mxu0 0
      %968 = vmatpush2.bf16.msra.mxu0 0
      %969 = vmatprep.subr.bf16.mxu0 0
      %970 = vmatpush2.bf16.msra.mxu0 0
      %971 = vmatprep.subr.bf16.mxu0 0
      %972 = vmatpush2.bf16.msra.mxu0 0
      %973 = vmatprep.subr.bf16.mxu0 0
      %974 = vmatpush2.bf16.msra.mxu0 0
      %975 = vmatprep.subr.bf16.mxu0 0
      %976 = vmatpush2.bf16.msra.mxu0 0
      %977 = vmatprep.subr.bf16.mxu0 0
      %978 = vmatpush2.bf16.msra.mxu0 0
      %979 = vmatprep.subr.bf16.mxu0 0
      %980 = vmatpush2.bf16.msra.mxu0 0
      %981 = vmatprep.mubr.bf16.mxu0 0
      %982 = vmatmul.mubr.bf16.gmra.mxu0 %v941
      %v983 = vpop.f32.mrf.mxu0
      %v984 = vadd.f32 %v916, %v983
      %v985 = vpop.f32.mrf.mxu0
      %v986 = vpop.f32.mrf.mxu0
      %v987 = vadd.f32 %v919, %v986
      %v988 = vpop.f32.mrf.mxu0
      %989 = vmatprep.mubr.bf16.mxu0 0
      %990 = vmatmul.mubr.bf16.gmra.mxu0 %v944
      %v991 = vpop.f32.mrf.mxu0
      %v992 = vadd.f32 %v924, %v991
      %v993 = vpop.f32.mrf.mxu0
      %v994 = vpop.f32.mrf.mxu0
      %v995 = vadd.f32 %v927, %v994
      %v996 = vpop.f32.mrf.mxu0
      %997 = vdwg.mxu0
      %v998 = vld [vmem:[#allocation2] sm:$0xe]
      %v999 = vld [vmem:[#allocation2 + $0xc] sm:$0xe]
      %v1004 = vrot.slane %v998, 5
      %v1005 = vrot.slane %v1004, 4
      %v1006 = vrot.slane %v811, 5
      %v1007 = vsel %vm634, %v1005, %v1006
      %v1008 = vrot.slane %v1006, 4
      %v1009 = vrot.slane %v815, 5
      %v1010 = vsel %vm634, %v1008, %v1009
      %v1011 = vrot.slane %v999, 5
      %v1012 = vrot.slane %v1011, 4
      %v1013 = vrot.slane %v813, 5
      %v1014 = vsel %vm634, %v1012, %v1013
      %v1015 = vrot.slane %v1013, 4
      %v1016 = vrot.slane %v816, 5
      %v1017 = vsel %vm634, %v1015, %v1016
      %v1018 = vld [vmem:[%s6 + $0x8] sm:$0xf]
      %v1019 = vunpack.c.l.b16 %v1007
      %v1020 = vunpack.c.l.b16 %v1010
      %v1021 = vunpack.c.l.b16 %v1014
      %v1022 = vunpack.c.l.b16 %v1017
      %v1023 = vpack.c.b16 %v1020, %v1019
      %v1024 = vpack.c.b16 %v1022, %v1021
      %v1026 = vsel %vm498, %v1023, 0
      %v1029 = vsel %vm498, %v1024, 0
      %v1032 = vsel %vm505, %v1018, 0
      %1034 = vmatprep.subr.bf16.mxu0 0
      %1035 = vmatpush1.bf16.msra.mxu0 0
      %1036 = vmatprep.subr.bf16.mxu0 0
      %1037 = vmatpush1.bf16.msra.mxu0 0
      %1038 = vmatprep.subr.bf16.mxu0 0
      %1039 = vmatpush1.bf16.msra.mxu0 0
      %1040 = vmatprep.subr.bf16.mxu0 0
      %1041 = vmatpush1.bf16.msra.mxu0 0
      %1042 = vmatprep.subr.bf16.mxu0 0
      %1043 = vmatpush1.bf16.msra.mxu0 0
      %1044 = vmatprep.subr.bf16.mxu0 0
      %1045 = vmatpush1.bf16.msra.mxu0 0
      %1046 = vmatprep.subr.bf16.mxu0 0
      %1047 = vmatpush1.bf16.msra.mxu0 0
      %1048 = vmatprep.subr.bf16.mxu0 0
      %1049 = vmatpush1.bf16.msra.mxu0 %v1032
      %1050 = vmatprep.subr.bf16.mxu0 0
      %1051 = vmatpush2.bf16.msra.mxu0 0
      %1052 = vmatprep.subr.bf16.mxu0 0
      %1053 = vmatpush2.bf16.msra.mxu0 0
      %1054 = vmatprep.subr.bf16.mxu0 0
      %1055 = vmatpush2.bf16.msra.mxu0 0
      %1056 = vmatprep.subr.bf16.mxu0 0
      %1057 = vmatpush2.bf16.msra.mxu0 0
      %1058 = vmatprep.subr.bf16.mxu0 0
      %1059 = vmatpush2.bf16.msra.mxu0 0
      %1060 = vmatprep.subr.bf16.mxu0 0
      %1061 = vmatpush2.bf16.msra.mxu0 0
      %1062 = vmatprep.subr.bf16.mxu0 0
      %1063 = vmatpush2.bf16.msra.mxu0 0
      %1064 = vmatprep.subr.bf16.mxu0 0
      %1065 = vmatpush2.bf16.msra.mxu0 0
      %1066 = vmatprep.mubr.bf16.mxu0 0
      %1067 = vmatmul.mubr.bf16.gmra.mxu0 %v1026
      %v1068 = vpop.f32.mrf.mxu0
      %v1069 = vadd.f32 0.0, %v1068
      %v1070 = vpop.f32.mrf.mxu0
      %v1071 = vpop.f32.mrf.mxu0
      %v1072 = vadd.f32 0.0, %v1071
      %v1073 = vpop.f32.mrf.mxu0
      %1074 = vmatprep.mubr.bf16.mxu0 0
      %1075 = vmatmul.mubr.bf16.gmra.mxu0 %v1029
      %v1076 = vpop.f32.mrf.mxu0
      %v1077 = vadd.f32 0.0, %v1076
      %v1078 = vpop.f32.mrf.mxu0
      %v1079 = vpop.f32.mrf.mxu0
      %v1080 = vadd.f32 0.0, %v1079
      %v1081 = vpop.f32.mrf.mxu0
      %1082 = vdwg.mxu0
      %v1083 = vadd.f32 %v984, %v1069
      %v1084 = vadd.f32 %v987, %v1072
      %v1085 = vadd.f32 %v992, %v1077
      %v1086 = vadd.f32 %v995, %v1080
      %v1088 = vlaneseq
      %v1089 = vshrl.u32 %v1088, 7
      %v1090 = vsub.s32 0, %v1089
      %v1091 = vrot.slane %v809, %v1090
      %v1093 = vadd.f32 %v1083, %v1091
      %v1094 = vadd.f32 %v1084, %v1091
      %v1095 = vadd.f32 %v1085, %v1091
      %v1096 = vadd.f32 %v1086, %v1091
      %v1097 = vld [vmem:[%s305] sm:$0xff]
      %v1098 = vld [vmem:[%s305 + $0x8] sm:$0xff]
      %v1099 = vld [vmem:[%s305 + $0x10] sm:$0xff]
      %v1100 = vld [vmem:[%s305 + $0x18] sm:$0xff]
      %v1101 = vadd.f32 %v1093, %v1097
      %v1102 = vadd.f32 %v1094, %v1098
      %v1103 = vadd.f32 %v1095, %v1099
      %v1104 = vadd.f32 %v1096, %v1100
      %1105 = vst.msk [vmem:[%s312] sm:$0xff] %vm498, %v1101
      %1106 = vst.msk [vmem:[%s312 + $0x8] sm:$0xff] %vm498, %v1102
      %1107 = vst.msk [vmem:[%s312 + $0x10] sm:$0xff] %vm498, %v1103
      %1108 = vst.msk [vmem:[%s312 + $0x18] sm:$0xff] %vm498, %v1104
      %s1109 = smul.u32 2, %s19
      %p1110 = scmp.lt.s32.totalorder %s1109, 7
      %s1111 = scalar_select %p1110, %s1109, 7
      %s1112 = smul.addr %s1111, 2
      %s1113 = smul.addr %s1112, 8
      %s1114 = scalar_lea.vmem %s8, %s1113
      // Predicated region
      $region53: #{tpu_custom_call.1} parent=51 // pred_check
        %p1115 = pneg %p210
      $region54: #{tpu_custom_call.1} parent=51 // pred_check_branch
        %1117 = sbr.rel (%p1115) target = $region56
      $region55: #{tpu_custom_call.1} parent=51 // pred_region
        %s1118 = smul.u32 2, %s19
      $region56: #{tpu_custom_call.1} parent=51 // pred_fallthru
        _
    $region52: #{tpu_custom_call.1} parent=5 // pred_fallthru
      _
    %p1119 = scmp.le.s32.totalorder 2, %s14
    // Predicated region
    $region57: #{tpu_custom_call.1} parent=5 // pred_check
      %p1120 = pneg %p1119
    $region58: #{tpu_custom_call.1} parent=5 // pred_check_branch
      %1122 = sbr.rel (%p1120) target = $region60
    $region59: #{tpu_custom_call.1} parent=5 // pred_region
      %s1123 = ssub.s32 %s14, 2
      // Predicated region
      $region61: #{tpu_custom_call.1} parent=59 // pred_check
        %p1124 = pneg %p216
      $region62: #{tpu_custom_call.1} parent=59 // pred_check_branch
        %1126 = sbr.rel (%p1124) target = $region64
      $region63: #{tpu_custom_call.1} parent=59 // pred_region
        %s1127 = smul.u32 2, %s20
        %p1128 = scmp.lt.s32.totalorder %s1127, 7
        %s1129 = scalar_select %p1128, %s1127, 7
        %s1130 = smul.addr %s1129, 2
        %s1131 = smul.addr %s1130, 8
        %s1132 = scalar_lea.vmem %s8, %s1131
      $region64: #{tpu_custom_call.1} parent=59 // pred_fallthru
        _
    $region60: #{tpu_custom_call.1} parent=5 // pred_fallthru
      _
  $region6: #{tpu_custom_call.1} parent=0 // loop_footer
    %s18 = sadd.s32 1, %s14
  $region7: #{tpu_custom_call.1} parent=0 // loop_footer_branch
    %13 = sbr.rel target = $region3
  $region8: #{tpu_custom_call.1} parent=0 // loop_exit
    _

</llo_original>
